<compile_context>
chip_gen: v5e
topology: v5e:2x2
jax: 0.10.0
libtpu: 0.0.40
codegen_flags: <defaults>
</compile_context>

<pallas_src>
import jax
import jax.numpy as jnp
from jax.experimental import pallas as pl
from jax.experimental.pallas import tpu as pltpu


def _transformer_head_kernel(x_ref, w2_ref, b2_ref, w3t_ref, b3_ref, w4t_ref,
                             b4_ref, out_ref):
    """One batch tile of: Conv1d(1,1,5,dil=2) -> LeakyReLU -> Linear(L_out,2)
    -> LeakyReLU -> (Dropout=id) -> Linear(2,C)."""
    x = x_ref[...].astype(jnp.float32)           # (TB, D), upcast after DMA (bf16-friendly)
    d = x.shape[-1]

    # ---- Conv1d(in=1, out=1, kernel=5, dilation=2, stride=1, padding=0) ----
    # Five full-width scalar*vector MACs; shifted taps come from XLU lane rolls
    # (roll by d-2t == roll by -2t), so the VPU work stays unmasked and lane-dense.
    # Lanes >= L_out carry wrapped garbage and are zeroed by the padded w3^T below.
    acc = b2_ref[0] + w2_ref[0] * x
    for t in range(1, 5):
        acc = acc + w2_ref[t] * pltpu.roll(x, shift=d - 2 * t, axis=1)
    y = jnp.where(acc >= 0.0, acc, 0.01 * acc)   # LeakyReLU(0.01)

    # ---- Linear(L_out -> 2) + LeakyReLU on the MXU (w3^T zero-padded to (D, 2)) ----
    z = jnp.dot(y, w3t_ref[...], preferred_element_type=jnp.float32) + b3_ref[...]
    z = jnp.where(z >= 0.0, z, 0.01 * z)
    # Dropout is the identity at inference time.

    # ---- Linear(2 -> n_classes) as two broadcast MACs (K=2 matmul would waste the MXU) ----
    w4t = w4t_ref[...]                           # (2, C)  (transposed torch weight)
    out = z[:, 0:1] * w4t[0:1, :] + z[:, 1:2] * w4t[1:2, :] + b4_ref[...]
    out_ref[...] = out.astype(out_ref.dtype)


def transformer_forward(x, conv_w, conv_b, w3, b3, w4, b4, *,
                        seq_len, embedding_dim, src_mask=None, tile_b=None):
    """Pallas equivalent of Transformer.forward (eval mode).

    x       : (B, seq_len, embedding_dim) or (B, seq_len*embedding_dim), f32 or bf16
    conv_w  : (5,)   Conv1d(1,1,5,dilation=2) weight (flattened)
    conv_b  : (1,)   Conv1d bias
    w3, b3  : (2, L_out), (2,)              torch Linear(L_out, 2) weight/bias
    w4, b4  : (n_classes, 2), (n_classes,)  torch Linear(2, n_classes) weight/bias
    """
    del src_mask  # unused in the reference forward
    if seq_len != 1:
        # Conv1d(in_channels=1) inside OutputFeedForward only accepts seq_len == 1.
        raise ValueError("Transformer.forward requires seq_len == 1 (Conv1d in_channels=1)")

    B = x.shape[0]
    D = seq_len * embedding_dim
    n_classes = w4.shape[0]
    l_out = D - 2 * (5 - 1)                      # kernel=5, dilation=2, padding=0, stride=1
    assert w3.shape == (2, l_out)

    x2 = x.reshape(B, D)                         # no copy, no dtype cast (keep HBM bytes low)
    itemsize = x2.dtype.itemsize
    sub = {4: 8, 2: 16, 1: 32}.get(itemsize, 8)  # sublane packing granularity per dtype

    if tile_b is None:
        if B <= 4 * sub:
            tile_b = sub * max(1, pl.cdiv(B, sub))
        else:
            # Aim for >= 4 blocks (>= 2 per TensorCore on v7x), cap the tile at 1024 rows
            # (1024x128 f32 = 512 KiB; ~1 MiB double-buffered -> fits every scoped-VMEM default).
            tile_b = min(1024, sub * pl.cdiv(pl.cdiv(B, 4), sub))
    grid_b = pl.cdiv(B, tile_b)                  # ragged last block handled by edge masking

    f32 = jnp.float32
    # w3^T zero-padded to (D, 2): kills the wrapped tail lanes introduced by the rolls.
    w3t_pad = jnp.zeros((D, 2), f32).at[:l_out, :].set(jnp.transpose(w3).astype(f32))
    b3r = b3.reshape(1, 2).astype(f32)
    w4t = jnp.transpose(w4).astype(f32)          # (2, C)
    b4r = b4.reshape(1, n_classes).astype(f32)   # (1, C)

    cost = pl.CostEstimate(
        flops=B * (2 * 5 * l_out + 2 * l_out * 2 + 2 * 2 * n_classes),
        transcendentals=0,
        bytes_accessed=(B * D * itemsize + B * n_classes * 4
                        + 4 * (5 + 1 + 2 * D + 2 + 2 * n_classes + n_classes)),
    )

    out = pl.pallas_call(
        _transformer_head_kernel,
        out_shape=jax.ShapeDtypeStruct((B, n_classes), jnp.float32),
        grid=(grid_b,),
        in_specs=[
            pl.BlockSpec((tile_b, D), lambda i: (i, 0)),          # x tile, lane-dense
            pl.BlockSpec(memory_space=pltpu.MemorySpace.SMEM),    # conv taps (5,)
            pl.BlockSpec(memory_space=pltpu.MemorySpace.SMEM),    # conv bias (1,)
            pl.BlockSpec((D, 2), lambda i: (0, 0)),               # w3^T padded, VMEM-resident
            pl.BlockSpec((1, 2), lambda i: (0, 0)),               # b3 (1, 2)
            pl.BlockSpec((2, n_classes), lambda i: (0, 0)),       # w4^T (2, C)
            pl.BlockSpec((1, n_classes), lambda i: (0, 0)),       # b4 (1, C)
        ],
        out_specs=pl.BlockSpec((tile_b, n_classes), lambda i: (i, 0)),
        compiler_params=pltpu.CompilerParams(
            dimension_semantics=("parallel",),                    # split batch across TCs (v7x)
        ),
        cost_estimate=cost,
    )(x2, conv_w.astype(f32), conv_b.astype(f32), w3t_pad, b3r, w4t, b4r)

    return out


def _reference_forward(x2, conv_w, conv_b, w3, b3, w4, b4):
    """Plain-JAX reference of Transformer.forward (eval mode)."""
    lhs = x2.astype(jnp.float32)[:, None, :]      # (B, 1, D)   N C W
    rhs = conv_w[None, None, :]                   # (1, 1, 5)   O I W
    y = jax.lax.conv_general_dilated(
        lhs, rhs, window_strides=(1,), padding="VALID", rhs_dilation=(2,),
        dimension_numbers=("NCH", "OIH", "NCH"))[:, 0, :] + conv_b[0]
    y = jnp.where(y >= 0.0, y, 0.01 * y)          # LeakyReLU(0.01)
    z = y @ w3.T + b3                             # Linear(L_out, 2)
    z = jnp.where(z >= 0.0, z, 0.01 * z)
    return z @ w4.T + b4                          # Linear(2, n_classes)


if __name__ == "__main__":
    key = jax.random.PRNGKey(0)
    ks = jax.random.split(key, 7)

    # Small shapes consistent with the module's forward:
    # Transformer(n_heads=4, seq_len=1, embedding_dim=128, hidden_dim=32, N=2,
    #             dropout=0.1, n_classes=4).  seq_len must be 1 (Conv1d in_channels=1).
    # batch=50 deliberately does not divide the tile -> exercises the no-pad ragged edge.
    batch = 50
    seq_len = 1
    embedding_dim = 128
    n_classes = 4
    D = seq_len * embedding_dim
    l_out = D - 8                                 # conv: k=5, dilation=2, padding=0, stride=1

    x = jax.random.normal(ks[0], (batch, seq_len, embedding_dim), dtype=jnp.float32)
    conv_w = 0.1 * jax.random.normal(ks[1], (5,), dtype=jnp.float32)
    conv_b = 0.1 * jax.random.normal(ks[2], (1,), dtype=jnp.float32)
    w3 = 0.1 * jax.random.normal(ks[3], (2, l_out), dtype=jnp.float32)       # Linear(L_out, 2).weight
    b3 = 0.1 * jax.random.normal(ks[4], (2,), dtype=jnp.float32)
    w4 = 0.1 * jax.random.normal(ks[5], (n_classes, 2), dtype=jnp.float32)   # Linear(2, C).weight
    b4 = 0.1 * jax.random.normal(ks[6], (n_classes,), dtype=jnp.float32)

    out = transformer_forward(x, conv_w, conv_b, w3, b3, w4, b4,
                              seq_len=seq_len, embedding_dim=embedding_dim,
                              src_mask=None)
    out = jax.block_until_ready(out)

    ref = _reference_forward(x.reshape(batch, D), conv_w, conv_b, w3, b3, w4, b4)
    assert out.shape == (batch, n_classes)
    err = float(jnp.max(jnp.abs(out - ref)))
    assert jnp.allclose(out, ref, atol=1e-4, rtol=1e-4), err

    # TODO(synk): Encoder / attention / positional-encoding sub-modules are dead code in
    # Transformer.forward (never called), so they are intentionally not implemented here.
    print("KERNEL_OK")
</pallas_src>

<mosaic_0001>
module attributes {stable_mosaic.version = 11 : i64} {
  func.func @_transformer_head_kernel(%arg0: i32, %arg1: memref<16x128xf32, #tpu.memory_space<vmem>>, %arg2: memref<5xf32, #tpu.memory_space<smem>>, %arg3: memref<1xf32, #tpu.memory_space<smem>>, %arg4: memref<128x2xf32, #tpu.memory_space<vmem>>, %arg5: memref<1x2xf32, #tpu.memory_space<vmem>>, %arg6: memref<2x4xf32, #tpu.memory_space<vmem>>, %arg7: memref<1x4xf32, #tpu.memory_space<vmem>>, %arg8: memref<16x4xf32, #tpu.memory_space<vmem>>) attributes {dimension_semantics = [#tpu.dimension_semantics<parallel>], iteration_bounds = array<i64: 4>, scalar_prefetch = 0 : i64, scratch_operands = 0 : i64, tpu.core_type = #tpu.core_type<tc>, window_params = [{transform_indices = @transform_0, window_bounds = array<i64: 16, 128>}, {transform_indices = @transform_1, window_bounds = array<i64: 5>}, {transform_indices = @transform_2, window_bounds = array<i64: 1>}, {pipeline_mode = #tpu.pipeline_mode<synchronous>, transform_indices = @transform_3, window_bounds = array<i64: 128, 2>}, {pipeline_mode = #tpu.pipeline_mode<synchronous>, transform_indices = @transform_4, window_bounds = array<i64: 1, 2>}, {pipeline_mode = #tpu.pipeline_mode<synchronous>, transform_indices = @transform_5, window_bounds = array<i64: 2, 4>}, {pipeline_mode = #tpu.pipeline_mode<synchronous>, transform_indices = @transform_6, window_bounds = array<i64: 1, 4>}, {transform_indices = @transform_7, window_bounds = array<i64: 16, 4>}]} {
    %c0 = arith.constant 0 : index
    %c0_0 = arith.constant 0 : index
    %0 = vector.load %arg1[%c0, %c0_0] : memref<16x128xf32, #tpu.memory_space<vmem>>, vector<16x128xf32>
    %c0_1 = arith.constant 0 : index
    %1 = memref.load %arg3[%c0_1] : memref<1xf32, #tpu.memory_space<smem>>
    %c0_2 = arith.constant 0 : index
    %2 = memref.load %arg2[%c0_2] : memref<5xf32, #tpu.memory_space<smem>>
    %3 = vector.broadcast %2 : f32 to vector<16x128xf32>
    %4 = arith.mulf %3, %0 : vector<16x128xf32>
    %5 = vector.broadcast %1 : f32 to vector<16x128xf32>
    %6 = arith.addf %5, %4 : vector<16x128xf32>
    %c1 = arith.constant 1 : index
    %7 = memref.load %arg2[%c1] : memref<5xf32, #tpu.memory_space<smem>>
    %c126_i32 = arith.constant 126 : i32
    %8 = tpu.dynamic_rotate %0 by %c126_i32 dim 1 : vector<16x128xf32>, i32 -> vector<16x128xf32>
    %9 = vector.broadcast %7 : f32 to vector<16x128xf32>
    %10 = arith.mulf %9, %8 : vector<16x128xf32>
    %11 = arith.addf %6, %10 : vector<16x128xf32>
    %c2 = arith.constant 2 : index
    %12 = memref.load %arg2[%c2] : memref<5xf32, #tpu.memory_space<smem>>
    %c124_i32 = arith.constant 124 : i32
    %13 = tpu.dynamic_rotate %0 by %c124_i32 dim 1 : vector<16x128xf32>, i32 -> vector<16x128xf32>
    %14 = vector.broadcast %12 : f32 to vector<16x128xf32>
    %15 = arith.mulf %14, %13 : vector<16x128xf32>
    %16 = arith.addf %11, %15 : vector<16x128xf32>
    %c3 = arith.constant 3 : index
    %17 = memref.load %arg2[%c3] : memref<5xf32, #tpu.memory_space<smem>>
    %c122_i32 = arith.constant 122 : i32
    %18 = tpu.dynamic_rotate %0 by %c122_i32 dim 1 : vector<16x128xf32>, i32 -> vector<16x128xf32>
    %19 = vector.broadcast %17 : f32 to vector<16x128xf32>
    %20 = arith.mulf %19, %18 : vector<16x128xf32>
    %21 = arith.addf %16, %20 : vector<16x128xf32>
    %c4 = arith.constant 4 : index
    %22 = memref.load %arg2[%c4] : memref<5xf32, #tpu.memory_space<smem>>
    %c120_i32 = arith.constant 120 : i32
    %23 = tpu.dynamic_rotate %0 by %c120_i32 dim 1 : vector<16x128xf32>, i32 -> vector<16x128xf32>
    %24 = vector.broadcast %22 : f32 to vector<16x128xf32>
    %25 = arith.mulf %24, %23 : vector<16x128xf32>
    %26 = arith.addf %21, %25 : vector<16x128xf32>
    %cst = arith.constant 0.000000e+00 : f32
    %27 = vector.broadcast %cst : f32 to vector<16x128xf32>
    %28 = arith.cmpf oge, %26, %27 : vector<16x128xf32>
    %cst_3 = arith.constant 0.00999999977 : f32
    %29 = vector.broadcast %cst_3 : f32 to vector<16x128xf32>
    %30 = arith.mulf %29, %26 : vector<16x128xf32>
    %31 = arith.select %28, %26, %30 : vector<16x128xi1>, vector<16x128xf32>
    %c0_4 = arith.constant 0 : index
    %c0_5 = arith.constant 0 : index
    %32 = vector.load %arg4[%c0_4, %c0_5] : memref<128x2xf32, #tpu.memory_space<vmem>>, vector<128x2xf32>
    %cst_6 = arith.constant dense<0.000000e+00> : vector<16x2xf32>
    %33 = tpu.matmul %31, %32, %cst_6 {dimension_numbers = #tpu.dot_dimension_numbers<[1], [0], [0], [1], [0, 0, 1, 1], [], []>} : vector<16x128xf32>, vector<128x2xf32>, vector<16x2xf32> -> vector<16x2xf32>
    %c0_7 = arith.constant 0 : index
    %c0_8 = arith.constant 0 : index
    %34 = vector.load %arg5[%c0_7, %c0_8] : memref<1x2xf32, #tpu.memory_space<vmem>>, vector<1x2xf32>
    %35 = vector.broadcast %34 : vector<1x2xf32> to vector<16x2xf32>
    %36 = arith.addf %33, %35 : vector<16x2xf32>
    %cst_9 = arith.constant 0.000000e+00 : f32
    %37 = vector.broadcast %cst_9 : f32 to vector<16x2xf32>
    %38 = arith.cmpf oge, %36, %37 : vector<16x2xf32>
    %cst_10 = arith.constant 0.00999999977 : f32
    %39 = vector.broadcast %cst_10 : f32 to vector<16x2xf32>
    %40 = arith.mulf %39, %36 : vector<16x2xf32>
    %41 = arith.select %38, %36, %40 : vector<16x2xi1>, vector<16x2xf32>
    %c0_11 = arith.constant 0 : index
    %c0_12 = arith.constant 0 : index
    %42 = vector.load %arg6[%c0_11, %c0_12] : memref<2x4xf32, #tpu.memory_space<vmem>>, vector<2x4xf32>
    %43 = vector.extract_strided_slice %41 {offsets = [0, 0], sizes = [16, 1], strides = [1, 1]} : vector<16x2xf32> to vector<16x1xf32>
    %44 = vector.extract_strided_slice %42 {offsets = [0, 0], sizes = [1, 4], strides = [1, 1]} : vector<2x4xf32> to vector<1x4xf32>
    %45 = vector.broadcast %43 : vector<16x1xf32> to vector<16x4xf32>
    %46 = vector.broadcast %44 : vector<1x4xf32> to vector<16x4xf32>
    %47 = arith.mulf %45, %46 : vector<16x4xf32>
    %48 = vector.extract_strided_slice %41 {offsets = [0, 1], sizes = [16, 1], strides = [1, 1]} : vector<16x2xf32> to vector<16x1xf32>
    %49 = vector.extract_strided_slice %42 {offsets = [1, 0], sizes = [1, 4], strides = [1, 1]} : vector<2x4xf32> to vector<1x4xf32>
    %50 = vector.broadcast %48 : vector<16x1xf32> to vector<16x4xf32>
    %51 = vector.broadcast %49 : vector<1x4xf32> to vector<16x4xf32>
    %52 = arith.mulf %50, %51 : vector<16x4xf32>
    %53 = arith.addf %47, %52 : vector<16x4xf32>
    %c0_13 = arith.constant 0 : index
    %c0_14 = arith.constant 0 : index
    %54 = vector.load %arg7[%c0_13, %c0_14] : memref<1x4xf32, #tpu.memory_space<vmem>>, vector<1x4xf32>
    %55 = vector.broadcast %54 : vector<1x4xf32> to vector<16x4xf32>
    %56 = arith.addf %53, %55 : vector<16x4xf32>
    %c0_15 = arith.constant 0 : index
    %c0_16 = arith.constant 0 : index
    %57 = vector.load %arg8[%c0_15, %c0_16] : memref<16x4xf32, #tpu.memory_space<vmem>>, vector<16x4xf32>
    tpu.vector_store %arg8[%c0_15, %c0_16], %56 {strides = array<i32>} : memref<16x4xf32, #tpu.memory_space<vmem>>, vector<16x4xf32>,
    return
  }
  func.func @transform_0(%arg0: i32) -> (i32, i32) {
    %c0_i32 = arith.constant 0 : i32
    %c0_i32_0 = arith.constant 0 : i32
    return %arg0, %c0_i32 : i32, i32
  }
  func.func @transform_1(%arg0: i32) -> i32 {
    %c0_i32 = arith.constant 0 : i32
    %c0_i32_0 = arith.constant 0 : i32
    return %c0_i32 : i32
  }
  func.func @transform_2(%arg0: i32) -> i32 {
    %c0_i32 = arith.constant 0 : i32
    %c0_i32_0 = arith.constant 0 : i32
    return %c0_i32 : i32
  }
  func.func @transform_3(%arg0: i32) -> (i32, i32) {
    %c0_i32 = arith.constant 0 : i32
    %c0_i32_0 = arith.constant 0 : i32
    %c0_i32_1 = arith.constant 0 : i32
    return %c0_i32, %c0_i32_0 : i32, i32
  }
  func.func @transform_4(%arg0: i32) -> (i32, i32) {
    %c0_i32 = arith.constant 0 : i32
    %c0_i32_0 = arith.constant 0 : i32
    %c0_i32_1 = arith.constant 0 : i32
    return %c0_i32, %c0_i32_0 : i32, i32
  }
  func.func @transform_5(%arg0: i32) -> (i32, i32) {
    %c0_i32 = arith.constant 0 : i32
    %c0_i32_0 = arith.constant 0 : i32
    %c0_i32_1 = arith.constant 0 : i32
    return %c0_i32, %c0_i32_0 : i32, i32
  }
  func.func @transform_6(%arg0: i32) -> (i32, i32) {
    %c0_i32 = arith.constant 0 : i32
    %c0_i32_0 = arith.constant 0 : i32
    %c0_i32_1 = arith.constant 0 : i32
    return %c0_i32, %c0_i32_0 : i32, i32
  }
  func.func @transform_7(%arg0: i32) -> (i32, i32) {
    %c0_i32 = arith.constant 0 : i32
    %c0_i32_0 = arith.constant 0 : i32
    return %arg0, %c0_i32 : i32, i32
  }
}

</mosaic_0001>

<llo_original>
// kernel: tpu_custom_call.1
$region0: #{tpu_custom_call.1}
  #allocation0 [shape = 'u32[]', space=smem, size = 0x4, offset = 0x4, fixed_abs, tag = 'smem constant byte address 0x4 - core index']
  #allocation1 [shape = 'u32[72,128]{1,0:T(1,128)}', space=vmem, size = 0x9000, scoped, tag = 'internal scratch']
  #allocation2 [shape = 'f32[1]{0:T(128)S(6)}', space=smem, size = 0x200, scoped, tag = 'scoped memory for tpu_custom_call.1']
  %s0 = inlined_call_operand.vmem [shape: f32[50,128], index: 0, kind: input, shape index: {}]
  %s1 = inlined_call_operand.vmem [shape: f32[5], index: 1, kind: input, shape index: {}]
  %s2 = inlined_call_operand.<no memory space> [shape: f32[1], index: 2, kind: input, shape index: {}]
  %s3 = inlined_call_operand.vmem [shape: f32[128,2], index: 3, kind: input, shape index: {}]
  %s4 = inlined_call_operand.vmem [shape: f32[1,2], index: 4, kind: input, shape index: {}]
  %s5 = inlined_call_operand.vmem [shape: f32[2,4], index: 5, kind: input, shape index: {}]
  %s6 = inlined_call_operand.vmem [shape: f32[1,4], index: 6, kind: input, shape index: {}]
  %s7 = inlined_call_operand.vmem [shape: f32[50,4], index: 7, kind: output, shape index: {}]
  %s8 = sld [smem:[#allocation0]]
  $region113: #{tpu_custom_call.1} parent=0
    _
  %s10 = ssub.s32 1, %s8
  %s11 = scalar_select 0, %s10, %s8
  %12 = sst [smem:[#allocation2]] %s2
  $region1: #{tpu_custom_call.1} parent=0
    #allocation3 [shape = 'u8[512]{0}', space=smem, size = 0x200, scoped, tag = 'input window, operand 1, single buffered']
    #allocation4 [shape = 's32[2]{0}', space=sflag, size = 0x8, scoped, tag = 'scoped memory for tpu_custom_call.1']
    #allocation5 [shape = 'u8[16384]{0}', space=vmem, size = 0x4000, scoped, tag = 'output window, operand 0']
    %13 = vsyncpa [#allocation4], 0
    loop: start=0, step=1, limit=6
    $region2: #{tpu_custom_call.1} parent=1 // loop_pre_header
      _
    $region3: #{tpu_custom_call.1} parent=1 // loop_header
      %s15 = sphi 0, %s19
      %p16 = scmp.ge.s32.totalorder %s15, 6
      %s25 = sphi 0, %s27
      %s28 = sphi 0, %s25
      %s29 = sphi 0, %s28
      %s45 = sphi 0, %s29
      %s49 = sphi 0, %s49
      %s51 = sphi 0, %s49
      %s52 = sphi 0, %s51
      %s66 = sphi 0, %s52
      %s70 = sphi 0, %s70
      %s72 = sphi 0, %s70
      %s73 = sphi 0, %s72
      %s87 = sphi 0, %s73
      %s91 = sphi 0, %s91
      %s93 = sphi 0, %s91
      %s94 = sphi 0, %s93
      %s108 = sphi 0, %s94
      %s112 = sphi 0, %s112
      %s114 = sphi 0, %s112
      %s115 = sphi 0, %s114
      %s129 = sphi 0, %s115
      %s133 = sphi 0, %s133
      %s135 = sphi 0, %s133
      %s136 = sphi 0, %s135
      %s150 = sphi 0, %s136
      %s154 = sphi 0, %s154
      %s156 = sphi 0, %s154
      %s157 = sphi 0, %s156
      %s171 = sphi 0, %s157
      %s177 = sphi 0, %s179
      %s180 = sphi 0, %s177
      %s181 = sphi 0, %s180
      %s197 = sphi 0, %s181
    $region4: #{tpu_custom_call.1} parent=1 // loop_header_branch
      %18 = sbr.rel (%p16) target = $region8
    $region5: #{tpu_custom_call.1} parent=1 // loop_body
      %s20 = ssub.s32 %s15, 1
      %s21 = ssub.s32 %s15, 2
      %s22 = sadd.s32 %s15, 1
      %s23 = ssub.s32 %s15, %s22
      %p24 = scmp.eq.s32.totalorder %s23, 0
      %s26 = sadd.s32 %s25, 1
      %s27 = scalar_select %p24, %s25, %s26
      %p30 = pneg %p24
      %p31 = scmp.eq.s32.totalorder %s15, 3
      %p32 = por %p30, %p31
      %p33 = scmp.ne.s32.totalorder %s25, %s28
      %p34 = scmp.eq.s32.totalorder %s15, 0
      %p35 = por %p33, %p34
      %p36 = scmp.ne.s32.totalorder %s25, %s28
      %p37 = scmp.eq.s32.totalorder %s20, 3
      %p38 = por %p36, %p37
      %p39 = scmp.ne.s32.totalorder %s28, %s29
      %p40 = scmp.eq.s32.totalorder %s20, 0
      %p41 = por %p39, %p40
      %p42 = scmp.ne.s32.totalorder %s28, %s29
      %p43 = scmp.eq.s32.totalorder %s21, 3
      %p44 = por %p42, %p43
      %p46 = scmp.ne.s32.totalorder %s29, %s45
      %p47 = scmp.eq.s32.totalorder %s21, 0
      %p48 = por %p46, %p47
      %s50 = sadd.s32 %s49, 1
      %p53 = scmp.eq.s32.totalorder %s15, 3
      %p54 = scmp.ne.s32.totalorder %s49, %s51
      %p55 = scmp.eq.s32.totalorder %s15, 0
      %p56 = por %p54, %p55
      %p57 = scmp.ne.s32.totalorder %s49, %s51
      %p58 = scmp.eq.s32.totalorder %s20, 3
      %p59 = por %p57, %p58
      %p60 = scmp.ne.s32.totalorder %s51, %s52
      %p61 = scmp.eq.s32.totalorder %s20, 0
      %p62 = por %p60, %p61
      %p63 = scmp.ne.s32.totalorder %s51, %s52
      %p64 = scmp.eq.s32.totalorder %s21, 3
      %p65 = por %p63, %p64
      %p67 = scmp.ne.s32.totalorder %s52, %s66
      %p68 = scmp.eq.s32.totalorder %s21, 0
      %p69 = por %p67, %p68
      %s71 = sadd.s32 %s70, 1
      %p74 = scmp.eq.s32.totalorder %s15, 3
      %p75 = scmp.ne.s32.totalorder %s70, %s72
      %p76 = scmp.eq.s32.totalorder %s15, 0
      %p77 = por %p75, %p76
      %p78 = scmp.ne.s32.totalorder %s70, %s72
      %p79 = scmp.eq.s32.totalorder %s20, 3
      %p80 = por %p78, %p79
      %p81 = scmp.ne.s32.totalorder %s72, %s73
      %p82 = scmp.eq.s32.totalorder %s20, 0
      %p83 = por %p81, %p82
      %p84 = scmp.ne.s32.totalorder %s72, %s73
      %p85 = scmp.eq.s32.totalorder %s21, 3
      %p86 = por %p84, %p85
      %p88 = scmp.ne.s32.totalorder %s73, %s87
      %p89 = scmp.eq.s32.totalorder %s21, 0
      %p90 = por %p88, %p89
      %s92 = sadd.s32 %s91, 1
      %p95 = scmp.eq.s32.totalorder %s15, 3
      %p96 = scmp.ne.s32.totalorder %s91, %s93
      %p97 = scmp.eq.s32.totalorder %s15, 0
      %p98 = por %p96, %p97
      %p99 = scmp.ne.s32.totalorder %s91, %s93
      %p100 = scmp.eq.s32.totalorder %s20, 3
      %p101 = por %p99, %p100
      %p102 = scmp.ne.s32.totalorder %s93, %s94
      %p103 = scmp.eq.s32.totalorder %s20, 0
      %p104 = por %p102, %p103
      %p105 = scmp.ne.s32.totalorder %s93, %s94
      %p106 = scmp.eq.s32.totalorder %s21, 3
      %p107 = por %p105, %p106
      %p109 = scmp.ne.s32.totalorder %s94, %s108
      %p110 = scmp.eq.s32.totalorder %s21, 0
      %p111 = por %p109, %p110
      %s113 = sadd.s32 %s112, 1
      %p116 = scmp.eq.s32.totalorder %s15, 3
      %p117 = scmp.ne.s32.totalorder %s112, %s114
      %p118 = scmp.eq.s32.totalorder %s15, 0
      %p119 = por %p117, %p118
      %p120 = scmp.ne.s32.totalorder %s112, %s114
      %p121 = scmp.eq.s32.totalorder %s20, 3
      %p122 = por %p120, %p121
      %p123 = scmp.ne.s32.totalorder %s114, %s115
      %p124 = scmp.eq.s32.totalorder %s20, 0
      %p125 = por %p123, %p124
      %p126 = scmp.ne.s32.totalorder %s114, %s115
      %p127 = scmp.eq.s32.totalorder %s21, 3
      %p128 = por %p126, %p127
      %p130 = scmp.ne.s32.totalorder %s115, %s129
      %p131 = scmp.eq.s32.totalorder %s21, 0
      %p132 = por %p130, %p131
      %s134 = sadd.s32 %s133, 1
      %p137 = scmp.eq.s32.totalorder %s15, 3
      %p138 = scmp.ne.s32.totalorder %s133, %s135
      %p139 = scmp.eq.s32.totalorder %s15, 0
      %p140 = por %p138, %p139
      %p141 = scmp.ne.s32.totalorder %s133, %s135
      %p142 = scmp.eq.s32.totalorder %s20, 3
      %p143 = por %p141, %p142
      %p144 = scmp.ne.s32.totalorder %s135, %s136
      %p145 = scmp.eq.s32.totalorder %s20, 0
      %p146 = por %p144, %p145
      %p147 = scmp.ne.s32.totalorder %s135, %s136
      %p148 = scmp.eq.s32.totalorder %s21, 3
      %p149 = por %p147, %p148
      %p151 = scmp.ne.s32.totalorder %s136, %s150
      %p152 = scmp.eq.s32.totalorder %s21, 0
      %p153 = por %p151, %p152
      %s155 = sadd.s32 %s154, 1
      %p158 = scmp.eq.s32.totalorder %s15, 3
      %p159 = scmp.ne.s32.totalorder %s154, %s156
      %p160 = scmp.eq.s32.totalorder %s15, 0
      %p161 = por %p159, %p160
      %p162 = scmp.ne.s32.totalorder %s154, %s156
      %p163 = scmp.eq.s32.totalorder %s20, 3
      %p164 = por %p162, %p163
      %p165 = scmp.ne.s32.totalorder %s156, %s157
      %p166 = scmp.eq.s32.totalorder %s20, 0
      %p167 = por %p165, %p166
      %p168 = scmp.ne.s32.totalorder %s156, %s157
      %p169 = scmp.eq.s32.totalorder %s21, 3
      %p170 = por %p168, %p169
      %p172 = scmp.ne.s32.totalorder %s157, %s171
      %p173 = scmp.eq.s32.totalorder %s21, 0
      %p174 = por %p172, %p173
      %s175 = ssub.s32 %s15, %s22
      %p176 = scmp.eq.s32.totalorder %s175, 0
      %s178 = sadd.s32 %s177, 1
      %s179 = scalar_select %p176, %s177, %s178
      %p182 = pneg %p176
      %p183 = scmp.eq.s32.totalorder %s15, 3
      %p184 = por %p182, %p183
      %p185 = scmp.ne.s32.totalorder %s177, %s180
      %p186 = scmp.eq.s32.totalorder %s15, 0
      %p187 = por %p185, %p186
      %p188 = scmp.ne.s32.totalorder %s177, %s180
      %p189 = scmp.eq.s32.totalorder %s20, 3
      %p190 = por %p188, %p189
      %p191 = scmp.ne.s32.totalorder %s180, %s181
      %p192 = scmp.eq.s32.totalorder %s20, 0
      %p193 = por %p191, %p192
      %p194 = scmp.ne.s32.totalorder %s180, %s181
      %p195 = scmp.eq.s32.totalorder %s21, 3
      %p196 = por %p194, %p195
      %p198 = scmp.ne.s32.totalorder %s181, %s197
      %p199 = scmp.eq.s32.totalorder %s21, 0
      %p200 = por %p198, %p199
      %p201 = scmp.le.s32.totalorder 1, %s15
      %p202 = scmp.lt.s32.totalorder %s15, 5
      %p203 = pnand %p201, %p202
      %p204 = pneg %p203
      // Predicated region
      $region9: #{tpu_custom_call.1} parent=5 // pred_check
        _
      $region10: #{tpu_custom_call.1} parent=5 // pred_check_branch
        %206 = sbr.rel (%p203) target = $region12
      $region11: #{tpu_custom_call.1} parent=5 // pred_region
        %s207 = ssub.s32 %s15, 1
        // Predicated region
        $region13: #{tpu_custom_call.1} parent=11 // pred_check
          %p208 = pneg %p62
        $region14: #{tpu_custom_call.1} parent=11 // pred_check_branch
          %210 = sbr.rel (%p208) target = $region16
        $region15: #{tpu_custom_call.1} parent=11 // pred_region
          %212 = vsyncadd [#allocation4], 0
          %s214 = sshll.u32 %s1, 4
          %s215 = int_to_ptr.vmem [resolvable:$true] %s214
          %217 = dma.vmem_to_smem %s215, 16, [#allocation3], [#allocation4]
        $region16: #{tpu_custom_call.1} parent=11 // pred_fallthru
          _
        // Predicated region
        $region17: #{tpu_custom_call.1} parent=11 // pred_check
          %p218 = pneg %p83
        $region18: #{tpu_custom_call.1} parent=11 // pred_check_branch
          %220 = sbr.rel (%p218) target = $region20
        $region19: #{tpu_custom_call.1} parent=11 // pred_region
          _
        $region20: #{tpu_custom_call.1} parent=11 // pred_fallthru
          _
        // Predicated region
        $region21: #{tpu_custom_call.1} parent=11 // pred_check
          %p221 = pneg %p104
        $region22: #{tpu_custom_call.1} parent=11 // pred_check_branch
          %223 = sbr.rel (%p221) target = $region24
        $region23: #{tpu_custom_call.1} parent=11 // pred_region
          _
        $region24: #{tpu_custom_call.1} parent=11 // pred_fallthru
          _
        // Predicated region
        $region25: #{tpu_custom_call.1} parent=11 // pred_check
          %p224 = pneg %p125
        $region26: #{tpu_custom_call.1} parent=11 // pred_check_branch
          %226 = sbr.rel (%p224) target = $region28
        $region27: #{tpu_custom_call.1} parent=11 // pred_region
          _
        $region28: #{tpu_custom_call.1} parent=11 // pred_fallthru
          _
        // Predicated region
        $region29: #{tpu_custom_call.1} parent=11 // pred_check
          %p227 = pneg %p146
        $region30: #{tpu_custom_call.1} parent=11 // pred_check_branch
          %229 = sbr.rel (%p227) target = $region32
        $region31: #{tpu_custom_call.1} parent=11 // pred_region
          _
        $region32: #{tpu_custom_call.1} parent=11 // pred_fallthru
          _
        // Predicated region
        $region33: #{tpu_custom_call.1} parent=11 // pred_check
          %p230 = pneg %p167
        $region34: #{tpu_custom_call.1} parent=11 // pred_check_branch
          %232 = sbr.rel (%p230) target = $region36
        $region35: #{tpu_custom_call.1} parent=11 // pred_region
          _
        $region36: #{tpu_custom_call.1} parent=11 // pred_fallthru
          _
      $region12: #{tpu_custom_call.1} parent=5 // pred_fallthru
        _
      %p233 = scmp.lt.s32.totalorder %s15, 4
      // Predicated region
      $region37: #{tpu_custom_call.1} parent=5 // pred_check
        %p234 = pneg %p233
      $region38: #{tpu_custom_call.1} parent=5 // pred_check_branch
        %236 = sbr.rel (%p234) target = $region40
      $region39: #{tpu_custom_call.1} parent=5 // pred_region
        // Predicated region
        $region41: #{tpu_custom_call.1} parent=39 // pred_check
          %p237 = pneg %p35
        $region42: #{tpu_custom_call.1} parent=39 // pred_check_branch
          %239 = sbr.rel (%p237) target = $region44
        $region43: #{tpu_custom_call.1} parent=39 // pred_region
          %s240 = smul.u32 2, %s15
          %s241 = ssub.s32 7, %s240
          %p242 = scmp.lt.s32.totalorder %s241, 2
          %s243 = scalar_select %p242, %s241, 2
          %s244 = smul.u32 8, %s243
          %p245 = scmp.lt.s32.totalorder %s240, 6
          %s246 = scalar_select %p245, %s240, 6
          %s247 = smul.addr %s246, 8
          %s248 = scalar_lea.vmem %s0, %s247
          %s249 = smul.u32 2, %s15
          %s250 = ssub.s32 7, %s249
          %p251 = scmp.lt.s32.totalorder %s250, 2
          %s252 = scalar_select %p251, %s250, 2
          %s253 = smul.u32 8, %s252
        $region44: #{tpu_custom_call.1} parent=39 // pred_fallthru
          _
      $region40: #{tpu_custom_call.1} parent=5 // pred_fallthru
        _
      %p254 = scmp.le.s32.totalorder 1, %s15
      %p255 = scmp.lt.s32.totalorder %s15, 5
      %p256 = pnand %p254, %p255
      %p257 = pneg %p256
      // Predicated region
      $region45: #{tpu_custom_call.1} parent=5 // pred_check
        _
      $region46: #{tpu_custom_call.1} parent=5 // pred_check_branch
        %259 = sbr.rel (%p256) target = $region48
      $region47: #{tpu_custom_call.1} parent=5 // pred_region
        %s260 = ssub.s32 %s15, 1
        // Predicated region
        $region49: #{tpu_custom_call.1} parent=47 // pred_check
          %p261 = pneg %p62
        $region50: #{tpu_custom_call.1} parent=47 // pred_check_branch
          %263 = sbr.rel (%p261) target = $region52
        $region51: #{tpu_custom_call.1} parent=47 // pred_region
          %265 = dma.done [#allocation4], 16
        $region52: #{tpu_custom_call.1} parent=47 // pred_fallthru
          _
        %266 = sfence
        %s267 = smul.u32 2, %s20
        %s268 = ssub.s32 7, %s267
        %p269 = scmp.lt.s32.totalorder %s268, 2
        %s270 = scalar_select %p269, %s268, 2
        %s271 = smul.u32 8, %s270
        %p272 = scmp.lt.s32.totalorder %s267, 6
        %s273 = scalar_select %p272, %s267, 6
        %s274 = smul.addr %s273, 8
        %s275 = scalar_lea.vmem %s0, %s274
        %p276 = pneg %p41
        %p277 = pneg %p38
        %p278 = pneg %p62
        %p279 = pneg %p59
        %p280 = pneg %p83
        %p281 = pneg %p80
        %p282 = pneg %p104
        %p283 = pneg %p101
        %p284 = pneg %p125
        %p285 = pneg %p122
        %p286 = pneg %p146
        %p287 = pneg %p143
        %p288 = pneg %p167
        %p289 = pneg %p164
        %p290 = pneg %p193
        %p291 = pneg %p190
        %s292 = sand.u32 %s180, 1
        %s293 = sand.u32 %s180, 1
        %s294 = smul.addr %s293, 16
        %s295 = scalar_lea.vmem [#allocation5], %s294
        %s296 = smul.u32 2, %s20
        %s297 = ssub.s32 7, %s296
        %p298 = scmp.lt.s32.totalorder %s297, 2
        %s299 = scalar_select %p298, %s297, 2
        %s300 = smul.u32 8, %s299
        %p301 = scmp.lt.s32.totalorder %s296, 6
        %s302 = scalar_select %p301, %s296, 6
        %s303 = smul.addr %s302, 8
        %s304 = scalar_lea.vmem %s0, %s303
        %s305 = smul.u32 2, %s20
        %s306 = ssub.s32 7, %s305
        %p307 = scmp.lt.s32.totalorder %s306, 2
        %s308 = scalar_select %p307, %s306, 2
        %s309 = smul.u32 8, %s308
        %s310 = smul.u32 2, %s20
        %s311 = ssub.s32 7, %s310
        %p312 = scmp.lt.s32.totalorder %s311, 2
        %s313 = scalar_select %p312, %s311, 2
        %s314 = smul.u32 8, %s313
        %v315 = vld [vmem:[%s304] sm:$0xff]
        %v316 = vld [vmem:[%s304 + $0x8] sm:$0xff]
        %s317 = sld [smem:[#allocation2]]
        %s318 = sld [smem:[#allocation3]]
        %v319 = vstv %s318
        %v320 = vmul.f32 %v319, %v315
        %v321 = vmul.f32 %v319, %v316
        %v322 = vstv %s317
        %v323 = vadd.f32 %v322, %v320
        %v324 = vadd.f32 %v322, %v321
        %s325 = sld [smem:[#allocation3 + $0x1]]
        %326 = vrot.lane.b32.xlu0 %v315, 126
        %v327 = vpop.permute.xlu0 %326
        %328 = vrot.lane.b32.xlu0 %v316, 126
        %v329 = vpop.permute.xlu0 %328
        %v330 = vstv %s325
        %v331 = vmul.f32 %v330, %v327
        %v332 = vmul.f32 %v330, %v329
        %v333 = vadd.f32 %v323, %v331
        %v334 = vadd.f32 %v324, %v332
        %s335 = sld [smem:[#allocation3 + $0x2]]
        %336 = vrot.lane.b32.xlu0 %v315, 124
        %v337 = vpop.permute.xlu0 %336
        %338 = vrot.lane.b32.xlu0 %v316, 124
        %v339 = vpop.permute.xlu0 %338
        %v340 = vstv %s335
        %v341 = vmul.f32 %v340, %v337
        %v342 = vmul.f32 %v340, %v339
        %v343 = vadd.f32 %v333, %v341
        %v344 = vadd.f32 %v334, %v342
        %s345 = sld [smem:[#allocation3 + $0x3]]
        %346 = vrot.lane.b32.xlu0 %v315, 122
        %v347 = vpop.permute.xlu0 %346
        %348 = vrot.lane.b32.xlu0 %v316, 122
        %v349 = vpop.permute.xlu0 %348
        %v350 = vstv %s345
        %v351 = vmul.f32 %v350, %v347
        %v352 = vmul.f32 %v350, %v349
        %v353 = vadd.f32 %v343, %v351
        %v354 = vadd.f32 %v344, %v352
        %s355 = sld [smem:[#allocation3 + $0x4]]
        %356 = vrot.lane.b32.xlu0 %v315, 120
        %v357 = vpop.permute.xlu0 %356
        %358 = vrot.lane.b32.xlu0 %v316, 120
        %v359 = vpop.permute.xlu0 %358
        %v360 = vstv %s355
        %v361 = vmul.f32 %v360, %v357
        %v362 = vmul.f32 %v360, %v359
        %v363 = vadd.f32 %v353, %v361
        %v364 = vadd.f32 %v354, %v362
        %vm365 = vcmp.ge.f32.partialorder %v363, 0.0
        %vm366 = vcmp.ge.f32.partialorder %v364, 0.0
        %v367 = vmul.f32 %v363, 0.01
        %v368 = vmul.f32 %v364, 0.01
        %v369 = vsel %vm365, %v363, %v367
        %v370 = vsel %vm366, %v364, %v368
        %v371 = vld [vmem:[%s3] sm:$0xff]
        %v372 = vld [vmem:[%s3 + $0x8] sm:$0xff]
        %v373 = vld [vmem:[%s3 + $0x10] sm:$0xff]
        %v374 = vld [vmem:[%s3 + $0x18] sm:$0xff]
        %v375 = vld [vmem:[%s3 + $0x20] sm:$0xff]
        %v376 = vld [vmem:[%s3 + $0x28] sm:$0xff]
        %v377 = vld [vmem:[%s3 + $0x30] sm:$0xff]
        %v378 = vld [vmem:[%s3 + $0x38] sm:$0xff]
        %v379 = vld [vmem:[%s3 + $0x40] sm:$0xff]
        %v380 = vld [vmem:[%s3 + $0x48] sm:$0xff]
        %v381 = vld [vmem:[%s3 + $0x50] sm:$0xff]
        %v382 = vld [vmem:[%s3 + $0x58] sm:$0xff]
        %v383 = vld [vmem:[%s3 + $0x60] sm:$0xff]
        %v384 = vld [vmem:[%s3 + $0x68] sm:$0xff]
        %v385 = vld [vmem:[%s3 + $0x70] sm:$0xff]
        %v386 = vld [vmem:[%s3 + $0x78] sm:$0xff]
        %v387 = vld [vmem:[%s4] sm:$0x1]
        %v389 = vperm.slane %v387, 0
        %391 = vmatpush.msra.mxu0 %v386
        %392 = vmatpush.msra.mxu0 %v385
        %393 = vmatpush.msra.mxu0 %v384
        %394 = vmatpush.msra.mxu0 %v383
        %395 = vmatpush.msra.mxu0 %v382
        %396 = vmatpush.msra.mxu0 %v381
        %397 = vmatpush.msra.mxu0 %v380
        %398 = vmatpush.msra.mxu0 %v379
        %399 = vmatpush.msra.mxu0 %v378
        %400 = vmatpush.msra.mxu0 %v377
        %401 = vmatpush.msra.mxu0 %v376
        %402 = vmatpush.msra.mxu0 %v375
        %403 = vmatpush.msra.mxu0 %v374
        %404 = vmatpush.msra.mxu0 %v373
        %405 = vmatpush.msra.mxu0 %v372
        %406 = vmatpush.msra.mxu0 %v371
        %407 = vmatmul.f32.gmra.mxu0 %v369
        %v408 = vpop.f32.mrf.mxu0
        %v409 = vadd.f32 %v389, %v408
        %410 = vmatmul.f32.gmra.mxu0 %v370
        %v411 = vpop.f32.mrf.mxu0
        %v412 = vadd.f32 %v389, %v411
        %413 = vdwg.mxu0
        %vm414 = vcmp.ge.f32.partialorder %v409, 0.0
        %vm415 = vcmp.ge.f32.partialorder %v412, 0.0
        %v416 = vmul.f32 %v409, 0.01
        %v417 = vmul.f32 %v412, 0.01
        %v418 = vsel %vm414, %v409, %v416
        %v419 = vsel %vm415, %v412, %v417
        %v420 = vld [vmem:[%s5] sm:$0x3]
        %422 = vset.pattern.permute.xlu0 0
        %423 = vperm.xlu0 %422, %v418
        %v424 = vpop.permute.xlu0 %423
        %427 = vset.pattern.permute.xlu0 0
        %428 = vperm.xlu0 %427, %v419
        %v429 = vpop.permute.xlu0 %428
        %v431 = vperm.slane %v420, 0
        %v432 = vmul.f32 %v424, %v431
        %v433 = vmul.f32 %v429, %v431
        %434 = vset.pattern.permute.xlu0 1
        %435 = vperm.xlu0 %434, %v418
        %v436 = vpop.permute.xlu0 %435
        %438 = vset.pattern.permute.xlu0 1
        %439 = vperm.xlu0 %438, %v419
        %v440 = vpop.permute.xlu0 %439
        %v442 = vperm.slane %v420, 1
        %v443 = vmul.f32 %v436, %v442
        %v444 = vmul.f32 %v440, %v442
        %v445 = vadd.f32 %v432, %v443
        %v446 = vadd.f32 %v433, %v444
        %v447 = vld [vmem:[%s6] sm:$0x1]
        %v449 = vperm.slane %v447, 0
        %v451 = vadd.f32 %v445, %v449
        %v452 = vadd.f32 %v446, %v449
        %vm453 = vcmask 31744
        %454 = vst.msk [vmem:[%s295] sm:$0xff] %vm453, %v451
        %455 = vst.msk [vmem:[%s295 + $0x8] sm:$0xff] %vm453, %v452
        %s456 = sand.u32 %s180, 1
        %s457 = sand.u32 %s180, 1
        %s458 = smul.addr %s457, 16
        %s459 = scalar_lea.vmem [#allocation5], %s458
        // Predicated region
        $region53: #{tpu_custom_call.1} parent=47 // pred_check
          %p460 = pneg %p190
        $region54: #{tpu_custom_call.1} parent=47 // pred_check_branch
          %462 = sbr.rel (%p460) target = $region56
        $region55: #{tpu_custom_call.1} parent=47 // pred_region
          %s463 = smul.u32 2, %s20
          %s464 = ssub.s32 7, %s463
          %p465 = scmp.lt.s32.totalorder %s464, 2
          %s466 = scalar_select %p465, %s464, 2
          %s467 = smul.u32 8, %s466
          %p468 = scmp.ne.s32.totalorder 0, %s467
          %s469 = smul.addr %s463, 8
          %s470 = scalar_lea.vmem %s7, %s469
          // Predicated region
          $region57: #{tpu_custom_call.1} parent=55 // pred_check
            %p471 = pneg %p468
          $region58: #{tpu_custom_call.1} parent=55 // pred_check_branch
            %473 = sbr.rel (%p471) target = $region60
          $region59: #{tpu_custom_call.1} parent=55 // pred_region
            // Predicated region
            $region61: #{tpu_custom_call.1} parent=59 // pred_check
              _
            $region62: #{tpu_custom_call.1} parent=59 // pred_check_branch
              %475 = sbr.rel (0) target = $region64
            $region63: #{tpu_custom_call.1} parent=59 // pred_region
              // Predicated region
              $region83: #{tpu_custom_call.1} parent=63 // pred_check
                _
              $region84: #{tpu_custom_call.1} parent=63 // pred_check_branch
                %527 = sbr.rel (0) target = $region86
              $region85: #{tpu_custom_call.1} parent=63 // pred_region
                %s528 = sshrl.u32 %s466, 1
                // While loop
                $region87: #{tpu_custom_call.1} parent=85 // loop_pre_header
                  _
                $region88: #{tpu_custom_call.1} parent=85 // loop_header
                  %s530 = sphi 0, %s532
                  %p531 = scmp.ge.s32.totalorder %s530, %s528
                  %s535 = sphi 0, %s544
                  %s536 = sphi %s459, %s547
                  %s537 = sphi %s470, %s548
                $region89: #{tpu_custom_call.1} parent=85 // loop_header_branch
                  %534 = sbr.rel (%p531) target = $region93
                $region90: #{tpu_custom_call.1} parent=85 // loop_body
                  %v538 = vld [vmem:[%s536] sm:$0xff]
                  %539 = vst [vmem:[%s537] sm:$0xff] %v538
                  %v540 = vld [vmem:[%s536 + $0x8] sm:$0xff]
                  %541 = vst [vmem:[%s537 + $0x8] sm:$0xff] %v540
                  %s542 = sadd.s32 1, %s535
                  %p543 = scmp.ge.s32.totalorder %s542, %s528
                  %s544 = scalar_select %p543, 0, %s542
                  %s545 = smul.u32 %s544, 16
                  %s546 = smul.u32 %s544, 16
                  %s547 = scalar_lea.vmem %s459, %s545 [#allocation5]
                  %s548 = scalar_lea.vmem %s470, %s546
                $region91: #{tpu_custom_call.1} parent=85 // loop_footer
                  %s532 = sadd.s32 %s530, 1
                $region92: #{tpu_custom_call.1} parent=85 // loop_footer_branch
                  %529 = sbr.rel target = $region88
                $region93: #{tpu_custom_call.1} parent=85 // loop_exit
                  _
                %s549 = sshrl.u32 %s466, 1
                %s550 = sand.u32 %s466, 1
                %s551 = smul.u32 %s549, 2
                %s552 = smul.u32 8, %s551
                %s553 = scalar_lea.vmem %s459, %s552 [#allocation5]
                %s554 = smul.u32 8, %s551
                %s555 = scalar_lea.vmem %s470, %s554
                // While loop
                $region94: #{tpu_custom_call.1} parent=85 // loop_pre_header
                  _
                $region95: #{tpu_custom_call.1} parent=85 // loop_header
                  %s557 = sphi 0, %s559
                  %p558 = scmp.ge.s32.totalorder %s557, %s550
                  %s562 = sphi 0, %s569
                  %s563 = sphi %s553, %s572
                  %s564 = sphi %s555, %s573
                $region96: #{tpu_custom_call.1} parent=85 // loop_header_branch
                  %561 = sbr.rel (%p558) target = $region100
                $region97: #{tpu_custom_call.1} parent=85 // loop_body
                  %v565 = vld [vmem:[%s563] sm:$0xff]
                  %566 = vst [vmem:[%s564] sm:$0xff] %v565
                  %s567 = sadd.s32 1, %s562
                  %p568 = scmp.ge.s32.totalorder %s567, %s550
                  %s569 = scalar_select %p568, 0, %s567
                  %s570 = smul.u32 %s569, 8
                  %s571 = smul.u32 %s569, 8
                  %s572 = scalar_lea.vmem %s553, %s570 [#allocation5]
                  %s573 = scalar_lea.vmem %s555, %s571
                $region98: #{tpu_custom_call.1} parent=85 // loop_footer
                  %s559 = sadd.s32 %s557, 1
                $region99: #{tpu_custom_call.1} parent=85 // loop_footer_branch
                  %556 = sbr.rel target = $region95
                $region100: #{tpu_custom_call.1} parent=85 // loop_exit
                  _
              $region86: #{tpu_custom_call.1} parent=63 // pred_fallthru
                _
              // Predicated region
              $region101: #{tpu_custom_call.1} parent=63 // pred_check
                _
              $region102: #{tpu_custom_call.1} parent=63 // pred_check_branch
                %575 = sbr.rel target = $region104
              $region103: #{tpu_custom_call.1} parent=63 // pred_region
                _
              $region104: #{tpu_custom_call.1} parent=63 // pred_fallthru
                _
            $region64: #{tpu_custom_call.1} parent=59 // pred_fallthru
              _
            // Predicated region
            $region65: #{tpu_custom_call.1} parent=59 // pred_check
              _
            $region66: #{tpu_custom_call.1} parent=59 // pred_check_branch
              %477 = sbr.rel target = $region68
            $region67: #{tpu_custom_call.1} parent=59 // pred_region
              %s479 = ssub.s32 256, 1
              %s480 = sshrl.u32 %s466, 1
              // While loop
              $region69: #{tpu_custom_call.1} parent=67 // loop_pre_header
                _
              $region70: #{tpu_custom_call.1} parent=67 // loop_header
                %s482 = sphi 0, %s484
                %p483 = scmp.ge.s32.totalorder %s482, %s480
                %s487 = sphi 0, %s496
                %s488 = sphi %s459, %s499
                %s489 = sphi %s470, %s500
              $region71: #{tpu_custom_call.1} parent=67 // loop_header_branch
                %486 = sbr.rel (%p483) target = $region75
              $region72: #{tpu_custom_call.1} parent=67 // loop_body
                %v490 = vld [vmem:[%s488] sm:%s479]
                %491 = vst [vmem:[%s489] sm:%s479] %v490
                %v492 = vld [vmem:[%s488 + $0x8] sm:%s479]
                %493 = vst [vmem:[%s489 + $0x8] sm:%s479] %v492
                %s494 = sadd.s32 1, %s487
                %p495 = scmp.ge.s32.totalorder %s494, %s480
                %s496 = scalar_select %p495, 0, %s494
                %s497 = smul.u32 %s496, 16
                %s498 = smul.u32 %s496, 16
                %s499 = scalar_lea.vmem %s459, %s497 [#allocation5]
                %s500 = scalar_lea.vmem %s470, %s498
              $region73: #{tpu_custom_call.1} parent=67 // loop_footer
                %s484 = sadd.s32 %s482, 1
              $region74: #{tpu_custom_call.1} parent=67 // loop_footer_branch
                %481 = sbr.rel target = $region70
              $region75: #{tpu_custom_call.1} parent=67 // loop_exit
                _
              %s501 = sshrl.u32 %s466, 1
              %s502 = sand.u32 %s466, 1
              %s503 = smul.u32 %s501, 2
              %s504 = smul.u32 8, %s503
              %s505 = scalar_lea.vmem %s459, %s504 [#allocation5]
              %s506 = smul.u32 8, %s503
              %s507 = scalar_lea.vmem %s470, %s506
              // While loop
              $region76: #{tpu_custom_call.1} parent=67 // loop_pre_header
                _
              $region77: #{tpu_custom_call.1} parent=67 // loop_header
                %s509 = sphi 0, %s511
                %p510 = scmp.ge.s32.totalorder %s509, %s502
                %s514 = sphi 0, %s521
                %s515 = sphi %s505, %s524
                %s516 = sphi %s507, %s525
              $region78: #{tpu_custom_call.1} parent=67 // loop_header_branch
                %513 = sbr.rel (%p510) target = $region82
              $region79: #{tpu_custom_call.1} parent=67 // loop_body
                %v517 = vld [vmem:[%s515] sm:%s479]
                %518 = vst [vmem:[%s516] sm:%s479] %v517
                %s519 = sadd.s32 1, %s514
                %p520 = scmp.ge.s32.totalorder %s519, %s502
                %s521 = scalar_select %p520, 0, %s519
                %s522 = smul.u32 %s521, 8
                %s523 = smul.u32 %s521, 8
                %s524 = scalar_lea.vmem %s505, %s522 [#allocation5]
                %s525 = scalar_lea.vmem %s507, %s523
              $region80: #{tpu_custom_call.1} parent=67 // loop_footer
                %s511 = sadd.s32 %s509, 1
              $region81: #{tpu_custom_call.1} parent=67 // loop_footer_branch
                %508 = sbr.rel target = $region77
              $region82: #{tpu_custom_call.1} parent=67 // loop_exit
                _
            $region68: #{tpu_custom_call.1} parent=59 // pred_fallthru
              _
          $region60: #{tpu_custom_call.1} parent=55 // pred_fallthru
            _
          %576 = vnop
        $region56: #{tpu_custom_call.1} parent=47 // pred_fallthru
          _
      $region48: #{tpu_custom_call.1} parent=5 // pred_fallthru
        _
      %p577 = scmp.le.s32.totalorder 2, %s15
      // Predicated region
      $region105: #{tpu_custom_call.1} parent=5 // pred_check
        %p578 = pneg %p577
      $region106: #{tpu_custom_call.1} parent=5 // pred_check_branch
        %580 = sbr.rel (%p578) target = $region108
      $region107: #{tpu_custom_call.1} parent=5 // pred_region
        %s581 = ssub.s32 %s15, 2
        // Predicated region
        $region109: #{tpu_custom_call.1} parent=107 // pred_check
          %p582 = pneg %p196
        $region110: #{tpu_custom_call.1} parent=107 // pred_check_branch
          %584 = sbr.rel (%p582) target = $region112
        $region111: #{tpu_custom_call.1} parent=107 // pred_region
          %s585 = sand.u32 %s181, 1
          %s586 = sand.u32 %s181, 1
          %s587 = smul.addr %s586, 16
          %s588 = scalar_lea.vmem [#allocation5], %s587
        $region112: #{tpu_custom_call.1} parent=107 // pred_fallthru
          _
      $region108: #{tpu_custom_call.1} parent=5 // pred_fallthru
        _
    $region6: #{tpu_custom_call.1} parent=1 // loop_footer
      %s19 = sadd.s32 1, %s15
    $region7: #{tpu_custom_call.1} parent=1 // loop_footer_branch
      %14 = sbr.rel target = $region3
    $region8: #{tpu_custom_call.1} parent=1 // loop_exit
      _
    %589 = vsyncpa [#allocation4], 1
    %s590 = scalar_lea.sflag [#allocation4], 1
    %591 = vsyncpa %s590, 1

</llo_original>
